<compile_context>
chip_gen: v5e
topology: v5e:2x2
jax: 0.10.0
libtpu: 0.0.40
codegen_flags: <defaults>
</compile_context>

<pallas_src>
import jax
import jax.numpy as jnp
from jax.experimental import pallas as pl
from jax.experimental.pallas import tpu as pltpu


def _pooler_kernel(x_ref, w_ref, b_ref, o_ref):
    # x_ref: [Bp, H]   first-token activations (resident across the grid)
    # w_ref: [H, TN]   pre-transposed weight tile ([in, out] layout)
    # b_ref: [1, TN]   bias tile
    # o_ref: [Bp, TN]  output tile
    y = jnp.dot(x_ref[...], w_ref[...], preferred_element_type=jnp.float32)
    y = y + b_ref[...]
    o_ref[...] = jnp.tanh(y).astype(o_ref.dtype)


def _pick_n_tile(H):
    """Output-feature tile: lane-aligned (multiple of 128) when possible,
    modest enough (<=512) to double-buffer comfortably within v7x's VMEM."""
    for tn in (512, 256, 128):
        if H % tn == 0:
            return tn
    # Small / odd hidden sizes: a full-width block (equals the array dim),
    # which always satisfies the (8, 128) block constraint.
    return H


def pooler_forward(hidden_states, weight, bias):
    """hidden_states: [B, S, H]; weight: [H, H] (PyTorch [out, in]); bias: [H]."""
    B, S, H = hidden_states.shape

    # Glue (cheap, one-time): first-token slice, batch padding to a sublane
    # group, and a one-time weight transpose to [in, out] layout so the kernel
    # does x @ Wt with no in-kernel transpose and lane-contiguous N-tiles.
    first_token = hidden_states[:, 0, :]                       # [B, H]
    Bp = max(8, ((B + 7) // 8) * 8)
    if Bp != B:
        first_token = jnp.pad(first_token, ((0, Bp - B), (0, 0)))
    w_t = jnp.transpose(weight)                                # [in, out] = [H, H]
    bias2d = bias.reshape(1, H)

    tn = _pick_n_tile(H)
    grid_n = H // tn

    out = pl.pallas_call(
        _pooler_kernel,
        out_shape=jax.ShapeDtypeStruct((Bp, H), hidden_states.dtype),
        grid_spec=pltpu.PrefetchScalarGridSpec(
            num_scalar_prefetch=0,
            grid=(grid_n,),
            in_specs=[
                # x stays resident in VMEM across all N-tiles.
                pl.BlockSpec((Bp, H), lambda j: (0, 0)),
                # Weight streamed in [H, TN] tiles along the output axis.
                pl.BlockSpec((H, tn), lambda j: (0, j)),
                # Matching bias tile.
                pl.BlockSpec((1, tn), lambda j: (0, j)),
            ],
            out_specs=pl.BlockSpec((Bp, tn), lambda j: (0, j)),
        ),
        compiler_params=pltpu.CompilerParams(
            # Independent output tiles -> parallel (2 TCs on v7x split the stream).
            dimension_semantics=("parallel",)),
    )(first_token, w_t, bias2d)

    return out[:B]


def pooler_reference(hidden_states, weight, bias):
    """Pure-JAX reference matching the PyTorch semantics exactly."""
    first_token = hidden_states[:, 0, :]
    return jnp.tanh(first_token @ weight.T + bias)


if __name__ == "__main__":
    # Small, deterministic example shapes: batch=2, seq=8, hidden=32.
    B, S, H = 2, 8, 32
    key = jax.random.PRNGKey(0)
    k_x, k_w, k_b = jax.random.split(key, 3)

    hidden_states = jax.random.normal(k_x, (B, S, H), dtype=jnp.float32)
    # Deterministic parameter init (synthetic — not a checkpoint load).
    weight = jax.random.normal(k_w, (H, H), dtype=jnp.float32) * 0.02
    bias = jax.random.normal(k_b, (H,), dtype=jnp.float32) * 0.02

    out = pooler_forward(hidden_states, weight, bias)
    out = jax.block_until_ready(out)

    ref = pooler_reference(hidden_states, weight, bias)
    assert out.shape == (B, H)
    assert jnp.allclose(out, ref, atol=1e-5, rtol=1e-5), "mismatch vs reference"

    print("KERNEL_OK")
</pallas_src>

<mosaic_0001>
module attributes {stable_mosaic.version = 11 : i64} {
  func.func @_pooler_kernel(%arg0: i32, %arg1: memref<8x32xf32, #tpu.memory_space<vmem>>, %arg2: memref<32x32xf32, #tpu.memory_space<vmem>>, %arg3: memref<1x32xf32, #tpu.memory_space<vmem>>, %arg4: memref<8x32xf32, #tpu.memory_space<vmem>>) attributes {dimension_semantics = [#tpu.dimension_semantics<parallel>], iteration_bounds = array<i64: 1>, scalar_prefetch = 0 : i64, scratch_operands = 0 : i64, tpu.core_type = #tpu.core_type<tc>, window_params = [{pipeline_mode = #tpu.pipeline_mode<synchronous>, transform_indices = @transform_0, window_bounds = array<i64: 8, 32>}, {transform_indices = @transform_1, window_bounds = array<i64: 32, 32>}, {transform_indices = @transform_2, window_bounds = array<i64: 1, 32>}, {transform_indices = @transform_3, window_bounds = array<i64: 8, 32>}]} {
    %c0 = arith.constant 0 : index
    %c0_0 = arith.constant 0 : index
    %0 = vector.load %arg1[%c0, %c0_0] : memref<8x32xf32, #tpu.memory_space<vmem>>, vector<8x32xf32>
    %c0_1 = arith.constant 0 : index
    %c0_2 = arith.constant 0 : index
    %1 = vector.load %arg2[%c0_1, %c0_2] : memref<32x32xf32, #tpu.memory_space<vmem>>, vector<32x32xf32>
    %cst = arith.constant dense<0.000000e+00> : vector<8x32xf32>
    %2 = tpu.matmul %0, %1, %cst {dimension_numbers = #tpu.dot_dimension_numbers<[1], [0], [0], [1], [0, 0, 1, 1], [], []>} : vector<8x32xf32>, vector<32x32xf32>, vector<8x32xf32> -> vector<8x32xf32>
    %c0_3 = arith.constant 0 : index
    %c0_4 = arith.constant 0 : index
    %3 = vector.load %arg3[%c0_3, %c0_4] : memref<1x32xf32, #tpu.memory_space<vmem>>, vector<1x32xf32>
    %4 = vector.broadcast %3 : vector<1x32xf32> to vector<8x32xf32>
    %5 = arith.addf %2, %4 : vector<8x32xf32>
    %6 = math.tanh %5 : vector<8x32xf32>
    %c0_5 = arith.constant 0 : index
    %c0_6 = arith.constant 0 : index
    %7 = vector.load %arg4[%c0_5, %c0_6] : memref<8x32xf32, #tpu.memory_space<vmem>>, vector<8x32xf32>
    tpu.vector_store %arg4[%c0_5, %c0_6], %6 {strides = array<i32>} : memref<8x32xf32, #tpu.memory_space<vmem>>, vector<8x32xf32>,
    return
  }
  func.func @transform_0(%arg0: i32) -> (i32, i32) {
    %c0_i32 = arith.constant 0 : i32
    %c0_i32_0 = arith.constant 0 : i32
    %c0_i32_1 = arith.constant 0 : i32
    return %c0_i32, %c0_i32_0 : i32, i32
  }
  func.func @transform_1(%arg0: i32) -> (i32, i32) {
    %c0_i32 = arith.constant 0 : i32
    %c0_i32_0 = arith.constant 0 : i32
    return %c0_i32, %arg0 : i32, i32
  }
  func.func @transform_2(%arg0: i32) -> (i32, i32) {
    %c0_i32 = arith.constant 0 : i32
    %c0_i32_0 = arith.constant 0 : i32
    return %c0_i32, %arg0 : i32, i32
  }
  func.func @transform_3(%arg0: i32) -> (i32, i32) {
    %c0_i32 = arith.constant 0 : i32
    %c0_i32_0 = arith.constant 0 : i32
    return %c0_i32, %arg0 : i32, i32
  }
}

</mosaic_0001>

<llo_original>
// kernel: tpu_custom_call.1
$region0: #{tpu_custom_call.1}
  #allocation0 [shape = 'u32[]', space=smem, size = 0x4, offset = 0x4, fixed_abs, tag = 'smem constant byte address 0x4 - core index']
  #allocation1 [shape = 'u32[72,128]{1,0:T(1,128)}', space=vmem, size = 0x9000, scoped, tag = 'internal scratch']
  %s0 = inlined_call_operand.hbm [shape: f32[8,32], index: 0, kind: input, shape index: {}]
  %s1 = inlined_call_operand.hbm [shape: f32[32,32], index: 1, kind: input, shape index: {}]
  %s2 = inlined_call_operand.vmem [shape: f32[1,32], index: 2, kind: input, shape index: {}]
  %s3 = inlined_call_operand.hbm [shape: f32[8,32], index: 3, kind: output, shape index: {}]
  %s4 = sld [smem:[#allocation0]]
  $region30: #{tpu_custom_call.1} parent=0
    _
  %s6 = ssub.s32 1, %s4
  %s7 = scalar_select 0, %s6, %s4
  $region1: #{tpu_custom_call.1} parent=0
    #allocation2 [shape = 'u8[4096]{0}', space=vmem, size = 0x1000, scoped, tag = 'input window, operand 0, single buffered']
    #allocation3 [shape = 's32[1]{0}', space=sflag, size = 0x4, scoped, tag = 'scoped memory for tpu_custom_call.1']
    #allocation4 [shape = 's32[1]{0}', space=sflag, size = 0x4, scoped, tag = 'scoped memory for tpu_custom_call.1']
    #allocation5 [shape = 'u8[16384]{0}', space=vmem, size = 0x4000, scoped, tag = 'input window, operand 1, single buffered']
    #allocation6 [shape = 's32[1]{0}', space=sflag, size = 0x4, scoped, tag = 'scoped memory for tpu_custom_call.1']
    #allocation7 [shape = 'u8[4096]{0}', space=vmem, size = 0x1000, scoped, tag = 'output window, operand 0, single buffered']
    %8 = vsyncpa [#allocation3], 0
    %9 = vsyncpa [#allocation6], 0
    %10 = vsyncpa [#allocation4], 0
    // Predicated region
    $region2: #{tpu_custom_call.1} parent=1 // pred_check
      _
    $region3: #{tpu_custom_call.1} parent=1 // pred_check_branch
      %12 = sbr.rel (0) target = $region5
    $region4: #{tpu_custom_call.1} parent=1 // pred_region
      %14 = vsyncadd [#allocation3], 0
      %s16 = sshll.u32 %s0, 4
      %s17 = int_to_ptr.hbm [resolvable:$true] %s16
      %s18 = sshll.u32 [#allocation2], 4
      %s19 = int_to_ptr.vmem [resolvable:$true] %s18
      %21 = dma.hbm_to_vmem [thread:$0]  %s17, 128, %s19, [#allocation3]
    $region5: #{tpu_custom_call.1} parent=1 // pred_fallthru
      _
    // Predicated region
    $region6: #{tpu_custom_call.1} parent=1 // pred_check
      _
    $region7: #{tpu_custom_call.1} parent=1 // pred_check_branch
      %23 = sbr.rel (0) target = $region9
    $region8: #{tpu_custom_call.1} parent=1 // pred_region
      %25 = vsyncadd [#allocation6], 0
      %s26 = sshll.u32 %s1, 4
      %s27 = int_to_ptr.hbm [resolvable:$true] %s26
      %s28 = sshll.u32 [#allocation5], 4
      %s29 = int_to_ptr.vmem [resolvable:$true] %s28
      %34 = dma.hbm_to_vmem [thread:$0]  %s27, 512, %s29, [#allocation6], 128, 128, 8
    $region9: #{tpu_custom_call.1} parent=1 // pred_fallthru
      _
    // Predicated region
    $region10: #{tpu_custom_call.1} parent=1 // pred_check
      _
    $region11: #{tpu_custom_call.1} parent=1 // pred_check_branch
      %36 = sbr.rel (0) target = $region13
    $region12: #{tpu_custom_call.1} parent=1 // pred_region
      _
    $region13: #{tpu_custom_call.1} parent=1 // pred_fallthru
      _
    // Predicated region
    $region14: #{tpu_custom_call.1} parent=1 // pred_check
      _
    $region15: #{tpu_custom_call.1} parent=1 // pred_check_branch
      %38 = sbr.rel (0) target = $region17
    $region16: #{tpu_custom_call.1} parent=1 // pred_region
      %40 = dma.done [#allocation3], 128
    $region17: #{tpu_custom_call.1} parent=1 // pred_fallthru
      _
    // Predicated region
    $region18: #{tpu_custom_call.1} parent=1 // pred_check
      _
    $region19: #{tpu_custom_call.1} parent=1 // pred_check_branch
      %42 = sbr.rel (0) target = $region21
    $region20: #{tpu_custom_call.1} parent=1 // pred_region
      %44 = dma.done [#allocation6], 512
    $region21: #{tpu_custom_call.1} parent=1 // pred_fallthru
      _
    %v45 = vld [vmem:[#allocation2] sm:$0xff]
    %v46 = vld [vmem:[#allocation5] sm:$0xff]
    %v47 = vld [vmem:[#allocation5 + $0x8] sm:$0xff]
    %v48 = vld [vmem:[#allocation5 + $0x10] sm:$0xff]
    %v49 = vld [vmem:[#allocation5 + $0x18] sm:$0xff]
    %v50 = vld [vmem:[%s2] sm:$0x1]
    %v52 = vperm.slane %v50, 0
    %vm54 = vcmask 261120
    %v56 = vsel %vm54, %v45, 0
    %58 = vmatpush.msra.mxu0 0.0
    %59 = vmatpush.msra.mxu0 0.0
    %60 = vmatpush.msra.mxu0 0.0
    %61 = vmatpush.msra.mxu0 0.0
    %62 = vmatpush.msra.mxu0 0.0
    %63 = vmatpush.msra.mxu0 0.0
    %64 = vmatpush.msra.mxu0 0.0
    %65 = vmatpush.msra.mxu0 0.0
    %66 = vmatpush.msra.mxu0 0.0
    %67 = vmatpush.msra.mxu0 0.0
    %68 = vmatpush.msra.mxu0 0.0
    %69 = vmatpush.msra.mxu0 0.0
    %70 = vmatpush.msra.mxu0 %v49
    %71 = vmatpush.msra.mxu0 %v48
    %72 = vmatpush.msra.mxu0 %v47
    %73 = vmatpush.msra.mxu0 %v46
    %74 = vmatmul.f32.gmra.mxu0 %v56
    %v75 = vpop.f32.mrf.mxu0
    %v76 = vadd.f32 %v52, %v75
    %77 = vdwg.mxu0
    %v78 = vtanh.pop %v76
    %79 = vst.msk [vmem:[#allocation7] sm:$0xff] %vm54, %v78
    // Predicated region
    $region22: #{tpu_custom_call.1} parent=1 // pred_check
      _
    $region23: #{tpu_custom_call.1} parent=1 // pred_check_branch
      %81 = sbr.rel (0) target = $region25
    $region24: #{tpu_custom_call.1} parent=1 // pred_region
      %83 = vsyncadd [#allocation4], 0
      %s85 = sshll.u32 [#allocation7], 4
      %s86 = int_to_ptr.vmem [resolvable:$true] %s85
      %s87 = sshll.u32 %s3, 4
      %s88 = int_to_ptr.hbm [resolvable:$true] %s87
      %90 = dma.vmem_to_hbm [thread:$0]  %s86, 128, %s88, [#allocation4]
    $region25: #{tpu_custom_call.1} parent=1 // pred_fallthru
      _
    // Predicated region
    $region26: #{tpu_custom_call.1} parent=1 // pred_check
      _
    $region27: #{tpu_custom_call.1} parent=1 // pred_check_branch
      %92 = sbr.rel (0) target = $region29
    $region28: #{tpu_custom_call.1} parent=1 // pred_region
      %94 = dma.done [#allocation4], 128
    $region29: #{tpu_custom_call.1} parent=1 // pred_fallthru
      _
    %95 = vsyncpa [#allocation3], 1
    %96 = vsyncpa [#allocation6], 1
    %97 = vsyncpa [#allocation4], 1

</llo_original>
